<compile_context>
chip_gen: v5e
topology: v5e:2x2
jax: 0.10.0
libtpu: 0.0.40
codegen_flags: <defaults>
</compile_context>

<pallas_src>
import functools

import jax
import jax.numpy as jnp
from jax.experimental import pallas as pl
from jax.experimental.pallas import tpu as pltpu

NEG_BIG = -9e15  # same masking constant as the PyTorch reference


@functools.lru_cache(maxsize=None)
def _vmem_limit_bytes():
    """~75% of physical VMEM, capped at 100 MiB (v5e/v6e ~96 MiB, v7x ~48 MiB)."""
    try:
        cap = pltpu.get_tpu_info().vmem_capacity_bytes
    except Exception:  # interpret mode / unknown chip
        cap = 64 * 1024 * 1024
    return int(min(cap * 3 // 4, 100 * 1024 * 1024))


# -----------------------------------------------------------------------------
# Kernel 1: fused projection for all heads (row-tiled).
#   wh  [TM, H*F] = x_tile @ W_stacked     (bf16 MXU, f32 accumulate, stored bf16)
#   f12 [TM, 2H]  = wh @ A_blockdiag       (one wide matmul; cols 0..H-1 = f1,
#                                           cols H..2H-1 = f2, per head)
# f1 / f2^T are split off by the wrapper in XLA (tiny [N, 2H] arrays).
# -----------------------------------------------------------------------------
def gat_project_kernel(x_ref, w_ref, a_ref, wh_ref, f12_ref):
    wh = jnp.dot(x_ref[...].astype(jnp.bfloat16), w_ref[...],
                 preferred_element_type=jnp.float32)               # [TM, H*F] f32
    wh_bf = wh.astype(jnp.bfloat16)
    wh_ref[...] = wh_bf                                            # bf16 residency downstream
    f12_ref[...] = jnp.dot(wh_bf, a_ref[...],
                           preferred_element_type=jnp.float32)     # [TM, 2H]


def gat_project(x, w_bf16, a_bf16, *, nheads, f_out, tm):
    n, f_in = x.shape
    two_h = a_bf16.shape[1]
    return pl.pallas_call(
        gat_project_kernel,
        grid=(n // tm,),
        in_specs=[
            pl.BlockSpec((tm, f_in), lambda i: (i, 0)),                # x tile (streamed)
            pl.BlockSpec((f_in, nheads * f_out), lambda i: (0, 0)),    # W stacked (bf16, resident)
            pl.BlockSpec((nheads * f_out, two_h), lambda i: (0, 0)),   # A block-diag (bf16, resident)
        ],
        out_specs=[
            pl.BlockSpec((tm, nheads * f_out), lambda i: (i, 0)),      # Wh (bf16, lane-dense)
            pl.BlockSpec((tm, two_h), lambda i: (i, 0)),               # f12
        ],
        out_shape=[
            jax.ShapeDtypeStruct((n, nheads * f_out), jnp.bfloat16),
            jax.ShapeDtypeStruct((n, two_h), jnp.float32),
        ],
        compiler_params=pltpu.CompilerParams(
            dimension_semantics=("parallel",),
            vmem_limit_bytes=_vmem_limit_bytes()),
    )(x, w_bf16, a_bf16)


# -----------------------------------------------------------------------------
# Kernel 2: fused multi-head masked attention + aggregation with online softmax.
# Grid: (dest-row tiles ["parallel"], source/key tiles ["arbitrary", last]).
# Per key tile and head:
#   e    = leakyrelu(f1_row + f2t_key) + mask_bias            (bias streamed bf16)
#   online-softmax update of (m, l, acc);  acc += softmax-part @ Wh_key   (bf16 MXU)
# On the last key tile: h_k = ELU(acc / l) written straight into the lane-dense
# concat slab; final=True additionally applies row-wise log_softmax.
# -----------------------------------------------------------------------------
def gat_attention_kernel(wh_ref, f1_ref, f2t_ref, bias_ref, out_ref,
                         m_sc, l_sc, acc_sc, *,
                         nheads: int, f_out: int, alpha: float, final: bool):
    j = pl.program_id(1)

    @pl.when(j == 0)
    def _init():
        m_sc[...] = jnp.full_like(m_sc, -jnp.inf)
        l_sc[...] = jnp.zeros_like(l_sc)
        acc_sc[...] = jnp.zeros_like(acc_sc)

    bias = bias_ref[...].astype(jnp.float32)                       # [TM, TN] additive mask
    wh = wh_ref[...]                                               # [TN, H*F] bf16 (key rows)
    # TODO(synk): if a bundle dump shows this kernel MXU-bound (not VPU/EUP-bound),
    #             batch the per-head aggregation dots into one batched dot_general to
    #             feed the 256-wide MXU better when f_out < 128.
    for k in range(nheads):                                        # static, small
        e = f1_ref[:, k:k + 1] + f2t_ref[k:k + 1, :]               # [TM,1]+[1,TN] -> [TM,TN]
        e = jnp.maximum(e, alpha * e)                              # LeakyReLU(alpha)
        e = e + bias                                               # mask non-edges (additive)
        m_prev = m_sc[:, k:k + 1]
        m_new = jnp.maximum(m_prev, jnp.max(e, axis=1, keepdims=True))
        corr = jnp.exp(m_prev - m_new)                             # online-softmax rescale
        p = jnp.exp(e - m_new)                                     # [TM, TN]
        l_sc[:, k:k + 1] = corr * l_sc[:, k:k + 1] + jnp.sum(p, axis=1, keepdims=True)
        acc_sc[:, k * f_out:(k + 1) * f_out] = (
            corr * acc_sc[:, k * f_out:(k + 1) * f_out]
            + jnp.dot(p.astype(jnp.bfloat16), wh[:, k * f_out:(k + 1) * f_out],
                      preferred_element_type=jnp.float32))
        m_sc[:, k:k + 1] = m_new

    @pl.when(j == pl.num_programs(1) - 1)
    def _finalize():
        for k in range(nheads):
            # l >= 1 after max-subtraction (the row-max element contributes exp(0)=1),
            # so the approximate reciprocal never divides by zero.
            inv_l = pl.reciprocal(l_sc[:, k:k + 1], approx=True)
            hk = acc_sc[:, k * f_out:(k + 1) * f_out] * inv_l
            hk = jnp.where(hk > 0, hk, jnp.expm1(hk))              # ELU
            if final:                                              # log_softmax(dim=1)
                hk = hk - jnp.max(hk, axis=1, keepdims=True)
                hk = hk - jnp.log(jnp.sum(jnp.exp(hk), axis=1, keepdims=True))
            out_ref[:, k * f_out:(k + 1) * f_out] = hk.astype(out_ref.dtype)


def gat_attention(wh, f1, f2t, bias, *, nheads, f_out, alpha, final, tm, tn, out_dtype):
    n = bias.shape[0]
    assert (not final) or nheads == 1, "final log_softmax assumes a single output head"
    kernel = functools.partial(gat_attention_kernel, nheads=nheads, f_out=f_out,
                               alpha=alpha, final=final)
    return pl.pallas_call(
        kernel,
        grid=(n // tm, n // tn),
        in_specs=[
            pl.BlockSpec((tn, nheads * f_out), lambda i, j: (j, 0)),   # Wh key rows (bf16)
            pl.BlockSpec((tm, nheads), lambda i, j: (i, 0)),           # f1 (dest rows)
            pl.BlockSpec((nheads, tn), lambda i, j: (0, j)),           # f2ᵀ (key cols)
            # TODO(synk): add pipeline_mode=pl.Buffered(3) here only if the trace
            #             shows exposed DMA on the bias stream.
            pl.BlockSpec((tm, tn), lambda i, j: (i, j)),               # mask bias tile (bf16)
        ],
        out_specs=pl.BlockSpec((tm, nheads * f_out), lambda i, j: (i, 0)),
        out_shape=jax.ShapeDtypeStruct((n, nheads * f_out), out_dtype),
        scratch_shapes=[
            pltpu.VMEM((tm, nheads), jnp.float32),                     # running max
            pltpu.VMEM((tm, nheads), jnp.float32),                     # running denominator
            pltpu.VMEM((tm, nheads * f_out), jnp.float32),             # output accumulator
        ],
        compiler_params=pltpu.CompilerParams(
            dimension_semantics=("parallel", "arbitrary"),
            vmem_limit_bytes=_vmem_limit_bytes()),
    )(wh, f1, f2t, bias)


# -----------------------------------------------------------------------------
# Tile pickers
# -----------------------------------------------------------------------------
def _pick_row_tile(n, target=512):
    """Dest-row tile: multiple of 8 dividing n; >= 2 tiles when possible (v7x megacore)."""
    if n % 8 != 0 or n <= 8:
        # TODO(synk): pad N (with fully-masked rows/cols) to a multiple of 8 for
        #             arbitrary node counts; falling back to an untiled block here.
        return n
    t = min(target, n)
    if t == n and n % 16 == 0:
        t = n // 2                          # guarantee >= 2 row tiles for the 2-TC v7x
    t = max(8, (t // 8) * 8)
    while t > 8 and n % t != 0:
        t -= 8
    return t if n % t == 0 else n


def _pick_key_tile(n, target=512):
    """Source/key tile: multiple of 128 dividing n, else the full axis."""
    if n % 128 != 0 or n <= 128:
        return n
    t = (min(target, n) // 128) * 128
    while t > 128 and n % t != 0:
        t -= 128
    return t if n % t == 0 else n


# -----------------------------------------------------------------------------
# Parameter init (deterministic, xavier_uniform with gain=1.414 like the module)
# -----------------------------------------------------------------------------
def xavier_uniform(key, shape, gain=1.414):
    fan_in, fan_out = shape[0], shape[1]
    bound = gain * (6.0 / (fan_in + fan_out)) ** 0.5
    return jax.random.uniform(key, shape, jnp.float32, -bound, bound)


def init_gatpa_params(key, nfeat, nhid, nclass, nheads):
    ws, a1s, a2s = [], [], []
    for _ in range(nheads):
        key, kw, ka = jax.random.split(key, 3)
        ws.append(xavier_uniform(kw, (nfeat, nhid)))
        a = xavier_uniform(ka, (2 * nhid, 1))
        a1s.append(a[:nhid, 0])
        a2s.append(a[nhid:, 0])
    key, kw, ka = jax.random.split(key, 3)
    a_out = xavier_uniform(ka, (2 * nclass, 1))
    return {
        "W_heads": jnp.concatenate(ws, axis=1),          # [nfeat, nheads*nhid]
        "a1_heads": jnp.stack(a1s, axis=0),              # [nheads, nhid]
        "a2_heads": jnp.stack(a2s, axis=0),              # [nheads, nhid]
        "W_out": xavier_uniform(kw, (nhid * nheads, nclass)),
        "a1_out": a_out[:nclass].T,                      # [1, nclass]
        "a2_out": a_out[nclass:].T,                      # [1, nclass]
    }


def _stack_attention_vectors(a1, a2):
    """Block-diagonal A [H*F, 2H]: col k = a1 of head k, col H+k = a2 of head k."""
    h, f = a1.shape
    a = jnp.zeros((h * f, 2 * h), jnp.float32)
    for k in range(h):
        a = a.at[k * f:(k + 1) * f, k].set(a1[k])
        a = a.at[k * f:(k + 1) * f, h + k].set(a2[k])
    return a


# -----------------------------------------------------------------------------
# GATpa forward (eval mode: input_dropout / dropout are identity)
# -----------------------------------------------------------------------------
# TODO(synk): dgl graph construction + edge weights in __init__ are unused by
#             forward(); dropout is training-only — both omitted (eval semantics).
def gatpa_forward(x, adj, params, alpha=0.1):
    nheads, nhid = params["a1_heads"].shape
    nclass = params["W_out"].shape[1]
    n = x.shape[0]
    tm = _pick_row_tile(n)
    tn = _pick_key_tile(n)

    # Additive attention-mask bias (bf16), computed once and reused by both layers.
    bias = jnp.where(adj > 0, jnp.float32(0.0), jnp.float32(NEG_BIG)).astype(jnp.bfloat16)

    # bf16 weight / attention-vector stacks (cast once in XLA, not per grid step).
    w1 = params["W_heads"].astype(jnp.bfloat16)
    a1 = _stack_attention_vectors(params["a1_heads"], params["a2_heads"]).astype(jnp.bfloat16)
    w2 = params["W_out"].astype(jnp.bfloat16)
    a2 = _stack_attention_vectors(params["a1_out"], params["a2_out"]).astype(jnp.bfloat16)

    # --- fused multi-head GAT layer (all heads, concat built in) ---------------
    wh, f12 = gat_project(x, w1, a1, nheads=nheads, f_out=nhid, tm=tm)
    h = gat_attention(wh, f12[:, :nheads], f12[:, nheads:].T, bias,
                      nheads=nheads, f_out=nhid, alpha=alpha, final=False,
                      tm=tm, tn=tn, out_dtype=jnp.bfloat16)        # [N, nheads*nhid] bf16

    # --- output GAT layer + ELU + log_softmax (fused into the attention kernel) -
    wh2, f12o = gat_project(h, w2, a2, nheads=1, f_out=nclass, tm=tm)
    out = gat_attention(wh2, f12o[:, :1], f12o[:, 1:].T, bias,
                        nheads=1, f_out=nclass, alpha=alpha, final=True,
                        tm=tm, tn=tn, out_dtype=jnp.float32)       # [N, nclass]
    return out


# -----------------------------------------------------------------------------
# Pure-JAX f32 reference (for tolerance validation of the bf16 kernel path)
# -----------------------------------------------------------------------------
def _ref_head(h, w, a1, a2, adj, alpha):
    wh = h @ w
    e = jax.nn.leaky_relu(jnp.outer(wh @ a1, jnp.ones(h.shape[0])) + (wh @ a2)[None, :],
                          negative_slope=alpha)
    e = jnp.where(adj > 0, e, NEG_BIG)
    attn = jax.nn.softmax(e, axis=1)
    return jax.nn.elu(attn @ wh)


def gatpa_reference(x, adj, params, alpha=0.1):
    nheads, nhid = params["a1_heads"].shape
    hs = [_ref_head(x, params["W_heads"][:, k * nhid:(k + 1) * nhid],
                    params["a1_heads"][k], params["a2_heads"][k], adj, alpha)
          for k in range(nheads)]
    h = jnp.concatenate(hs, axis=1)
    out = _ref_head(h, params["W_out"], params["a1_out"][0], params["a2_out"][0], adj, alpha)
    return jax.nn.log_softmax(out, axis=1)


if __name__ == "__main__":
    # Small shapes consistent with the module: N nodes, nfeat features.
    N, NFEAT, NHID, NCLASS, NHEADS = 8, 16, 8, 4, 4

    key = jax.random.PRNGKey(0)
    kx, kp = jax.random.split(key)

    x = jax.random.normal(kx, (N, NFEAT), jnp.float32)

    # Deterministic dense adjacency: self loops + ring (symmetric), weights > 0.
    idx = jnp.arange(N)
    adj = (jnp.eye(N, dtype=jnp.float32)
           + (idx[:, None] == ((idx + 1) % N)[None, :]).astype(jnp.float32)
           + (idx[:, None] == ((idx - 1) % N)[None, :]).astype(jnp.float32))

    params = init_gatpa_params(kp, NFEAT, NHID, NCLASS, NHEADS)

    out = gatpa_forward(x, adj, params)
    jax.block_until_ready(out)

    assert out.shape == (N, NCLASS)
    assert bool(jnp.all(jnp.isfinite(out)))
    # log_softmax rows should sum (in prob space) to ~1
    assert bool(jnp.allclose(jnp.sum(jnp.exp(out), axis=1), 1.0, atol=1e-4))
    # bf16-MXU kernel path vs. pure f32 reference (loose tolerance for bf16/approx-recip)
    ref = gatpa_reference(x, adj, params)
    assert bool(jnp.allclose(out, ref, atol=0.3)), float(jnp.max(jnp.abs(out - ref)))

    print("KERNEL_OK")
</pallas_src>

<mosaic_0001>
module attributes {stable_mosaic.version = 11 : i64} {
  func.func @gat_project_kernel(%arg0: i32, %arg1: memref<8x16xf32, #tpu.memory_space<vmem>>, %arg2: memref<16x32xbf16, #tpu.memory_space<vmem>>, %arg3: memref<32x8xbf16, #tpu.memory_space<vmem>>, %arg4: memref<8x32xbf16, #tpu.memory_space<vmem>>, %arg5: memref<8x8xf32, #tpu.memory_space<vmem>>) attributes {dimension_semantics = [#tpu.dimension_semantics<parallel>], iteration_bounds = array<i64: 1>, scalar_prefetch = 0 : i64, scratch_operands = 0 : i64, tpu.core_type = #tpu.core_type<tc>, window_params = [{transform_indices = @transform_0, window_bounds = array<i64: 8, 16>}, {pipeline_mode = #tpu.pipeline_mode<synchronous>, transform_indices = @transform_1, window_bounds = array<i64: 16, 32>}, {pipeline_mode = #tpu.pipeline_mode<synchronous>, transform_indices = @transform_2, window_bounds = array<i64: 32, 8>}, {transform_indices = @transform_3, window_bounds = array<i64: 8, 32>}, {transform_indices = @transform_4, window_bounds = array<i64: 8, 8>}]} {
    %c0 = arith.constant 0 : index
    %c0_0 = arith.constant 0 : index
    %0 = vector.load %arg1[%c0, %c0_0] : memref<8x16xf32, #tpu.memory_space<vmem>>, vector<8x16xf32>
    %1 = arith.truncf %0 : vector<8x16xf32> to vector<8x16xbf16>
    %c0_1 = arith.constant 0 : index
    %c0_2 = arith.constant 0 : index
    %2 = vector.load %arg2[%c0_1, %c0_2] : memref<16x32xbf16, #tpu.memory_space<vmem>>, vector<16x32xbf16>
    %cst = arith.constant dense<0.000000e+00> : vector<8x32xf32>
    %3 = tpu.matmul %1, %2, %cst {dimension_numbers = #tpu.dot_dimension_numbers<[1], [0], [0], [1], [0, 0, 1, 1], [], []>} : vector<8x16xbf16>, vector<16x32xbf16>, vector<8x32xf32> -> vector<8x32xf32>
    %4 = arith.truncf %3 : vector<8x32xf32> to vector<8x32xbf16>
    %c0_3 = arith.constant 0 : index
    %c0_4 = arith.constant 0 : index
    %5 = vector.load %arg4[%c0_3, %c0_4] : memref<8x32xbf16, #tpu.memory_space<vmem>>, vector<8x32xbf16>
    tpu.vector_store %arg4[%c0_3, %c0_4], %4 {strides = array<i32>} : memref<8x32xbf16, #tpu.memory_space<vmem>>, vector<8x32xbf16>,
    %c0_5 = arith.constant 0 : index
    %c0_6 = arith.constant 0 : index
    %6 = vector.load %arg3[%c0_5, %c0_6] : memref<32x8xbf16, #tpu.memory_space<vmem>>, vector<32x8xbf16>
    %cst_7 = arith.constant dense<0.000000e+00> : vector<8x8xf32>
    %7 = tpu.matmul %4, %6, %cst_7 {dimension_numbers = #tpu.dot_dimension_numbers<[1], [0], [0], [1], [0, 0, 1, 1], [], []>} : vector<8x32xbf16>, vector<32x8xbf16>, vector<8x8xf32> -> vector<8x8xf32>
    %c0_8 = arith.constant 0 : index
    %c0_9 = arith.constant 0 : index
    %8 = vector.load %arg5[%c0_8, %c0_9] : memref<8x8xf32, #tpu.memory_space<vmem>>, vector<8x8xf32>
    tpu.vector_store %arg5[%c0_8, %c0_9], %7 {strides = array<i32>} : memref<8x8xf32, #tpu.memory_space<vmem>>, vector<8x8xf32>,
    return
  }
  func.func @transform_0(%arg0: i32) -> (i32, i32) {
    %c0_i32 = arith.constant 0 : i32
    %c0_i32_0 = arith.constant 0 : i32
    return %arg0, %c0_i32 : i32, i32
  }
  func.func @transform_1(%arg0: i32) -> (i32, i32) {
    %c0_i32 = arith.constant 0 : i32
    %c0_i32_0 = arith.constant 0 : i32
    %c0_i32_1 = arith.constant 0 : i32
    return %c0_i32, %c0_i32_0 : i32, i32
  }
  func.func @transform_2(%arg0: i32) -> (i32, i32) {
    %c0_i32 = arith.constant 0 : i32
    %c0_i32_0 = arith.constant 0 : i32
    %c0_i32_1 = arith.constant 0 : i32
    return %c0_i32, %c0_i32_0 : i32, i32
  }
  func.func @transform_3(%arg0: i32) -> (i32, i32) {
    %c0_i32 = arith.constant 0 : i32
    %c0_i32_0 = arith.constant 0 : i32
    return %arg0, %c0_i32 : i32, i32
  }
  func.func @transform_4(%arg0: i32) -> (i32, i32) {
    %c0_i32 = arith.constant 0 : i32
    %c0_i32_0 = arith.constant 0 : i32
    return %arg0, %c0_i32 : i32, i32
  }
}

</mosaic_0001>

<llo_original>
// kernel: tpu_custom_call.1
$region0: #{tpu_custom_call.1}
  #allocation0 [shape = 'u32[]', space=smem, size = 0x4, offset = 0x4, fixed_abs, tag = 'smem constant byte address 0x4 - core index']
  #allocation1 [shape = 'u32[72,128]{1,0:T(1,128)}', space=vmem, size = 0x9000, scoped, tag = 'internal scratch']
  %s0 = inlined_call_operand.vmem [shape: f32[8,16], index: 0, kind: input, shape index: {}]
  %s1 = inlined_call_operand.vmem [shape: bf16[16,32], index: 1, kind: input, shape index: {}]
  %s2 = inlined_call_operand.vmem [shape: bf16[32,8], index: 2, kind: input, shape index: {}]
  %s3 = inlined_call_operand.hbm [shape: bf16[8,32], index: 3, kind: output, shape index: {0}]
  %s4 = inlined_call_operand.hbm [shape: f32[8,8], index: 4, kind: output, shape index: {1}]
  %5 = xla_tuple %s3, %s4
  %s6 = sld [smem:[#allocation0]]
  $region30: #{tpu_custom_call.1} parent=0
    _
  %s8 = ssub.s32 1, %s6
  %s9 = scalar_select 0, %s8, %s6
  $region1: #{tpu_custom_call.1} parent=0
    #allocation2 [shape = 'u8[2048]{0}', space=vmem, size = 0x800, scoped, tag = 'output window, operand 0, single buffered']
    #allocation3 [shape = 's32[1]{0}', space=sflag, size = 0x4, scoped, tag = 'scoped memory for tpu_custom_call.1']
    #allocation4 [shape = 'u8[4096]{0}', space=vmem, size = 0x1000, scoped, tag = 'output window, operand 1, single buffered']
    #allocation5 [shape = 's32[1]{0}', space=sflag, size = 0x4, scoped, tag = 'scoped memory for tpu_custom_call.1']
    %10 = vsyncpa [#allocation3], 0
    %11 = vsyncpa [#allocation5], 0
    // Predicated region
    $region2: #{tpu_custom_call.1} parent=1 // pred_check
      _
    $region3: #{tpu_custom_call.1} parent=1 // pred_check_branch
      %13 = sbr.rel (0) target = $region5
    $region4: #{tpu_custom_call.1} parent=1 // pred_region
      _
    $region5: #{tpu_custom_call.1} parent=1 // pred_fallthru
      _
    // Predicated region
    $region6: #{tpu_custom_call.1} parent=1 // pred_check
      _
    $region7: #{tpu_custom_call.1} parent=1 // pred_check_branch
      %15 = sbr.rel (0) target = $region9
    $region8: #{tpu_custom_call.1} parent=1 // pred_region
      _
    $region9: #{tpu_custom_call.1} parent=1 // pred_fallthru
      _
    // Predicated region
    $region10: #{tpu_custom_call.1} parent=1 // pred_check
      _
    $region11: #{tpu_custom_call.1} parent=1 // pred_check_branch
      %17 = sbr.rel (0) target = $region13
    $region12: #{tpu_custom_call.1} parent=1 // pred_region
      _
    $region13: #{tpu_custom_call.1} parent=1 // pred_fallthru
      _
    %v19 = vld [vmem:[%s0] sm:$0xff]
    %v20 = vpack.c.bf16 %v19, %v19
    %v21 = vld [vmem:[%s1] sm:$0xf]
    %v22 = vld [vmem:[%s1 + $0x4] sm:$0xf]
    %v25 = vunpack.c.l.b16 %v21
    %v26 = vunpack.c.l.b16 %v22
    %v27 = vpack.c.b16 %v26, %v25
    %vm29 = vcmask 130048
    %v31 = vsel %vm29, %v20, 0
    %33 = vmatpush.bf16.msra.mxu0 0
    %34 = vmatpush.bf16.msra.mxu0 0
    %35 = vmatpush.bf16.msra.mxu0 0
    %36 = vmatpush.bf16.msra.mxu0 0
    %37 = vmatpush.bf16.msra.mxu0 0
    %38 = vmatpush.bf16.msra.mxu0 0
    %39 = vmatpush.bf16.msra.mxu0 0
    %40 = vmatpush.bf16.msra.mxu0 %v27
    %41 = vmatmul.bf16.gmra.mxu0 %v31
    %v42 = vpop.f32.mrf.mxu0
    %v43 = vadd.f32 0.0, %v42
    %v44 = vpop.f32.mrf.mxu0
    %45 = vdwg.mxu0
    %v46 = vpack.c.bf16 %v43, %v43
    %vm47 = vcmask 257024
    %48 = vst.msk [vmem:[#allocation2] sm:$0xf] %vm47, %v46
    %v49 = vld [vmem:[%s2] sm:$0xf]
    %v50 = vld [vmem:[%s2 + $0x4] sm:$0xf]
    %v51 = vld [vmem:[%s2 + $0x8] sm:$0xf]
    %v52 = vld [vmem:[%s2 + $0xc] sm:$0xf]
    %v57 = vunpack.c.l.b16 %v49
    %v58 = vunpack.c.l.b16 %v50
    %v59 = vunpack.c.l.b16 %v51
    %v60 = vunpack.c.l.b16 %v52
    %v61 = vpack.c.b16 %v58, %v57
    %v62 = vpack.c.b16 %v60, %v59
    %vm65 = vcmask 261120
    %v67 = vsel %vm65, %v46, 0
    %69 = vmatpush.bf16.msra.mxu0 0
    %70 = vmatpush.bf16.msra.mxu0 0
    %71 = vmatpush.bf16.msra.mxu0 0
    %72 = vmatpush.bf16.msra.mxu0 0
    %73 = vmatpush.bf16.msra.mxu0 0
    %74 = vmatpush.bf16.msra.mxu0 0
    %75 = vmatpush.bf16.msra.mxu0 %v62
    %76 = vmatpush.bf16.msra.mxu0 %v61
    %77 = vmatmul.bf16.gmra.mxu0 %v67
    %v78 = vpop.f32.mrf.mxu0
    %v79 = vadd.f32 0.0, %v78
    %v80 = vpop.f32.mrf.mxu0
    %81 = vdwg.mxu0
    %vm82 = vcmask 64512
    %83 = vst.msk [vmem:[#allocation4] sm:$0xff] %vm82, %v79
    // Predicated region
    $region14: #{tpu_custom_call.1} parent=1 // pred_check
      _
    $region15: #{tpu_custom_call.1} parent=1 // pred_check_branch
      %85 = sbr.rel (0) target = $region17
    $region16: #{tpu_custom_call.1} parent=1 // pred_region
      %87 = vsyncadd [#allocation3], 0
      %s89 = sshll.u32 [#allocation2], 4
      %s90 = int_to_ptr.vmem [resolvable:$true] %s89
      %s91 = sshll.u32 %s3, 4
      %s92 = int_to_ptr.hbm [resolvable:$true] %s91
      %94 = dma.vmem_to_hbm [thread:$0]  %s90, 64, %s92, [#allocation3]
    $region17: #{tpu_custom_call.1} parent=1 // pred_fallthru
      _
    // Predicated region
    $region18: #{tpu_custom_call.1} parent=1 // pred_check
      _
    $region19: #{tpu_custom_call.1} parent=1 // pred_check_branch
      %96 = sbr.rel (0) target = $region21
    $region20: #{tpu_custom_call.1} parent=1 // pred_region
      %98 = vsyncadd [#allocation5], 0
      %s100 = sshll.u32 [#allocation4], 4
      %s101 = int_to_ptr.vmem [resolvable:$true] %s100
      %s102 = sshll.u32 %s4, 4
      %s103 = int_to_ptr.hbm [resolvable:$true] %s102
      %105 = dma.vmem_to_hbm [thread:$0]  %s101, 128, %s103, [#allocation5]
    $region21: #{tpu_custom_call.1} parent=1 // pred_fallthru
      _
    // Predicated region
    $region22: #{tpu_custom_call.1} parent=1 // pred_check
      _
    $region23: #{tpu_custom_call.1} parent=1 // pred_check_branch
      %107 = sbr.rel (0) target = $region25
    $region24: #{tpu_custom_call.1} parent=1 // pred_region
      %109 = dma.done [#allocation3], 64
    $region25: #{tpu_custom_call.1} parent=1 // pred_fallthru
      _
    // Predicated region
    $region26: #{tpu_custom_call.1} parent=1 // pred_check
      _
    $region27: #{tpu_custom_call.1} parent=1 // pred_check_branch
      %111 = sbr.rel (0) target = $region29
    $region28: #{tpu_custom_call.1} parent=1 // pred_region
      %113 = dma.done [#allocation5], 128
    $region29: #{tpu_custom_call.1} parent=1 // pred_fallthru
      _
    %114 = vsyncpa [#allocation3], 1
    %115 = vsyncpa [#allocation5], 1

</llo_original>
